<compile_context>
chip_gen: v7x
topology: tpu7x:2x2x1
jax: 0.10.0
libtpu: 0.0.40
codegen_flags: <defaults>
</compile_context>

<pallas_src>
import jax
import jax.numpy as jnp
import numpy as np
from jax.experimental import pallas as pl
from jax.experimental.pallas import tpu as pltpu


def attention_kernel(enc_ref, decproj_ref, w_enc_ref, v_ref, out_ref):
    # enc_ref:     (TB, S, F_enc)  encoder outputs for TB batch elements
    # decproj_ref: (TB, D_h)       precomputed dec @ W_dec + bias
    # w_enc_ref:   (F_enc, D_h)    attention.weight^T, encoder part (grid-invariant)
    # v_ref:       (1, D_h)        v.weight (grid-invariant)
    # out_ref:     (TB, F_enc)     context vectors (lane/sublane-dense slab)
    TB, S, F = enc_ref.shape
    D = w_enc_ref.shape[1]

    enc = enc_ref[...]                                            # (TB, S, F)

    # One fused energy matmul over all TB*S rows (single MXU call per step).
    pre = jnp.dot(enc.reshape(TB * S, F), w_enc_ref[...],
                  preferred_element_type=jnp.float32)             # (TB*S, D)
    pre = pre.reshape(TB, S, D) + decproj_ref[...][:, None, :]    # + (dec@W_dec + b)
    energy = jnp.tanh(pre)                                        # (TB, S, D)

    # Attention scores: elementwise multiply with v row + lane reduce
    # (avoids a tiny (TB*S, D) @ (D, 1) matmul on the MXU).
    v_b = v_ref[...].reshape(1, 1, D)
    att = jnp.sum(energy * v_b, axis=-1)                          # (TB, S)

    # Softmax over the sequence axis (full S is resident in this block).
    m = jnp.max(att, axis=-1, keepdims=True)                      # (TB, 1)
    e = jnp.exp(att - m)                                          # (TB, S)
    denom_inv = pl.reciprocal(jnp.sum(e, axis=-1, keepdims=True), approx=True)
    w = e * denom_inv                                             # (TB, S)

    # Context: weighted sum over the sequence -> dense (TB, F) store.
    context = jnp.sum(w[:, :, None] * enc, axis=1)                # (TB, F)
    out_ref[...] = context.astype(out_ref.dtype)


def _choose_batch_tile(B, S, F_enc, D_h, target_rows=1024, vmem_budget=8 * 1024 * 1024):
    """Pick TB so TB*S is a few hundred MXU rows, TB divides B, the tile fits
    comfortably in VMEM, and (preferably) TB is sublane-aligned (multiple of 8)."""
    # Rough per-batch-element footprint in f32 (input block + energy temp + output).
    bytes_per_b = 4 * (S * F_enc + S * D_h + F_enc + D_h)
    cap_rows = max(1, target_rows // max(S, 1))
    cap_vmem = max(1, vmem_budget // max(bytes_per_b, 1))
    cap = min(cap_rows, cap_vmem)
    if B <= cap:
        return B
    best_any, best_aligned = 1, 0
    for tb in range(1, cap + 1):
        if B % tb == 0:
            best_any = tb
            if tb % 8 == 0:
                best_aligned = tb
    return best_aligned if best_aligned else best_any


def attention_forward(output_encoder, last_hidden_decoder, attn_weight, attn_bias, v_weight):
    """
    output_encoder:      (B, S, 2*E_h)        float32
    last_hidden_decoder: (B, D_h)             float32
    attn_weight:         (D_h, 2*E_h + D_h)   PyTorch nn.Linear weight (out, in)
    attn_bias:           (D_h,)
    v_weight:            (1, D_h)             nn.Linear(D_h, 1, bias=False)
    returns context:     (B, 1, 2*E_h)
    """
    B, S, F_enc = output_encoder.shape
    D_h = last_hidden_decoder.shape[1]

    # Split attention weight into encoder / decoder parts ((in, out) layout).
    w_t = attn_weight.T                        # (2*E_h + D_h, D_h)
    w_enc = w_t[:F_enc, :]                     # (F_enc, D_h)
    w_dec = w_t[F_enc:, :]                     # (D_h,  D_h)

    # Hoisted decoder projection + bias: one batched matmul in plain XLA
    # (done once per call, independent of the seq-length grid).
    dec_proj = last_hidden_decoder @ w_dec + attn_bias[None, :]   # (B, D_h)
    v_row = v_weight.reshape(1, D_h)

    TB = _choose_batch_tile(B, S, F_enc, D_h)
    grid = (B // TB,)

    out2d = pl.pallas_call(
        attention_kernel,
        out_shape=jax.ShapeDtypeStruct((B, F_enc), output_encoder.dtype),
        grid_spec=pltpu.PrefetchScalarGridSpec(
            num_scalar_prefetch=0,
            grid=grid,
            in_specs=[
                pl.BlockSpec((TB, S, F_enc), lambda i: (i, 0, 0)),
                pl.BlockSpec((TB, D_h), lambda i: (i, 0)),
                pl.BlockSpec((F_enc, D_h), lambda i: (0, 0)),   # grid-invariant
                pl.BlockSpec((1, D_h), lambda i: (0, 0)),       # grid-invariant
            ],
            out_specs=pl.BlockSpec((TB, F_enc), lambda i: (i, 0)),
        ),
        compiler_params=pltpu.CompilerParams(
            dimension_semantics=("parallel",),
        ),
    )(output_encoder, dec_proj, w_enc, v_row)

    return out2d[:, None, :]                   # (B, 1, F_enc)


def _reference(output_encoder, last_hidden_decoder, attn_weight, attn_bias, v_weight):
    B, S, F_enc = output_encoder.shape
    dec_rep = jnp.broadcast_to(last_hidden_decoder[:, None, :],
                               (B, S, last_hidden_decoder.shape[1]))
    cat = jnp.concatenate([output_encoder, dec_rep], axis=2)
    energy = jnp.tanh(jnp.einsum("bsf,df->bsd", cat, attn_weight) + attn_bias)
    attention = jnp.einsum("bsd,od->bso", energy, v_weight)[..., 0]   # (B, S)
    weights = jax.nn.softmax(attention, axis=1)
    context = jnp.einsum("bs,bsf->bf", weights, output_encoder)[:, None, :]
    return context


if __name__ == "__main__":
    # Small shapes consistent with the module's forward:
    # encoder_hidden_size = 16  -> encoder feature dim = 32
    # decoder_hidden_size = 32
    B, S = 2, 8
    E_h, D_h = 16, 32
    F_enc = 2 * E_h

    key = jax.random.PRNGKey(0)
    k1, k2, k3, k4, k5 = jax.random.split(key, 5)

    output_encoder = jax.random.normal(k1, (B, S, F_enc), dtype=jnp.float32)
    last_hidden_decoder = jax.random.normal(k2, (B, D_h), dtype=jnp.float32)

    # Deterministic parameters (shapes match the nn.Linear definitions).
    attn_weight = 0.1 * jax.random.normal(k3, (D_h, F_enc + D_h), dtype=jnp.float32)
    attn_bias = 0.1 * jax.random.normal(k4, (D_h,), dtype=jnp.float32)
    v_weight = 0.1 * jax.random.normal(k5, (1, D_h), dtype=jnp.float32)

    ctx = attention_forward(output_encoder, last_hidden_decoder,
                            attn_weight, attn_bias, v_weight)
    ctx = jax.block_until_ready(ctx)

    ref = _reference(output_encoder, last_hidden_decoder,
                     attn_weight, attn_bias, v_weight)
    # Tolerance accounts for the approx (EUP) reciprocal in the softmax normalizer.
    np.testing.assert_allclose(np.asarray(ctx), np.asarray(ref), rtol=2e-3, atol=2e-3)

    assert ctx.shape == (B, 1, F_enc)
    print("KERNEL_OK")
</pallas_src>

<mosaic_0001>
module attributes {stable_mosaic.version = 11 : i64} {
  func.func @attention_kernel(%arg0: i32, %arg1: memref<2x8x32xf32, #tpu.memory_space<vmem>>, %arg2: memref<2x32xf32, #tpu.memory_space<vmem>>, %arg3: memref<32x32xf32, #tpu.memory_space<vmem>>, %arg4: memref<1x32xf32, #tpu.memory_space<vmem>>, %arg5: memref<2x32xf32, #tpu.memory_space<vmem>>) attributes {dimension_semantics = [#tpu.dimension_semantics<parallel>], iteration_bounds = array<i64: 1>, scalar_prefetch = 0 : i64, scratch_operands = 0 : i64, tpu.core_type = #tpu.core_type<tc>, window_params = [{transform_indices = @transform_0, window_bounds = array<i64: 2, 8, 32>}, {transform_indices = @transform_1, window_bounds = array<i64: 2, 32>}, {pipeline_mode = #tpu.pipeline_mode<synchronous>, transform_indices = @transform_2, window_bounds = array<i64: 32, 32>}, {pipeline_mode = #tpu.pipeline_mode<synchronous>, transform_indices = @transform_3, window_bounds = array<i64: 1, 32>}, {transform_indices = @transform_4, window_bounds = array<i64: 2, 32>}]} {
    %c0 = arith.constant 0 : index
    %c0_0 = arith.constant 0 : index
    %c0_1 = arith.constant 0 : index
    %0 = vector.load %arg1[%c0, %c0_0, %c0_1] : memref<2x8x32xf32, #tpu.memory_space<vmem>>, vector<2x8x32xf32>
    %1 = vector.shape_cast %0 : vector<2x8x32xf32> to vector<16x32xf32>
    %c0_2 = arith.constant 0 : index
    %c0_3 = arith.constant 0 : index
    %2 = vector.load %arg3[%c0_2, %c0_3] : memref<32x32xf32, #tpu.memory_space<vmem>>, vector<32x32xf32>
    %cst = arith.constant dense<0.000000e+00> : vector<16x32xf32>
    %3 = tpu.matmul %1, %2, %cst {dimension_numbers = #tpu.dot_dimension_numbers<[1], [0], [0], [1], [0, 0, 1, 1], [], []>} : vector<16x32xf32>, vector<32x32xf32>, vector<16x32xf32> -> vector<16x32xf32>
    %4 = vector.shape_cast %3 : vector<16x32xf32> to vector<2x8x32xf32>
    %c0_4 = arith.constant 0 : index
    %c0_5 = arith.constant 0 : index
    %5 = vector.load %arg2[%c0_4, %c0_5] : memref<2x32xf32, #tpu.memory_space<vmem>>, vector<2x32xf32>
    %6 = vector.shape_cast %5 : vector<2x32xf32> to vector<2x1x32xf32>
    %7 = vector.broadcast %6 : vector<2x1x32xf32> to vector<2x8x32xf32>
    %8 = arith.addf %4, %7 : vector<2x8x32xf32>
    %9 = math.tanh %8 : vector<2x8x32xf32>
    %c0_6 = arith.constant 0 : index
    %c0_7 = arith.constant 0 : index
    %10 = vector.load %arg4[%c0_6, %c0_7] : memref<1x32xf32, #tpu.memory_space<vmem>>, vector<1x32xf32>
    %11 = vector.shape_cast %10 : vector<1x32xf32> to vector<1x1x32xf32>
    %12 = vector.broadcast %11 : vector<1x1x32xf32> to vector<2x8x32xf32>
    %13 = arith.mulf %9, %12 : vector<2x8x32xf32>
    %cst_8 = arith.constant dense<0.000000e+00> : vector<2x8xf32>
    %14 = vector.multi_reduction <add>, %13, %cst_8 [2] : vector<2x8x32xf32> to vector<2x8xf32>
    %cst_9 = arith.constant dense<0xFF800000> : vector<2xf32>
    %15 = vector.multi_reduction <maximumf>, %14, %cst_9 [1] : vector<2x8xf32> to vector<2xf32>
    %16 = vector.shape_cast %15 : vector<2xf32> to vector<2x1xf32>
    %17 = vector.broadcast %16 : vector<2x1xf32> to vector<2x8xf32>
    %18 = arith.subf %14, %17 : vector<2x8xf32>
    %19 = math.exp %18 : vector<2x8xf32>
    %cst_10 = arith.constant dense<0.000000e+00> : vector<2xf32>
    %20 = vector.multi_reduction <add>, %19, %cst_10 [1] : vector<2x8xf32> to vector<2xf32>
    %21 = vector.shape_cast %20 : vector<2xf32> to vector<2x1xf32>
    %22 = tpu.reciprocal %21 {approx = true} : vector<2x1xf32> -> vector<2x1xf32>
    %23 = vector.broadcast %22 : vector<2x1xf32> to vector<2x8xf32>
    %24 = arith.mulf %19, %23 : vector<2x8xf32>
    %25 = vector.shape_cast %24 : vector<2x8xf32> to vector<2x8x1xf32>
    %26 = vector.broadcast %25 : vector<2x8x1xf32> to vector<2x8x32xf32>
    %27 = arith.mulf %26, %0 : vector<2x8x32xf32>
    %cst_11 = arith.constant dense<0.000000e+00> : vector<2x32xf32>
    %28 = vector.multi_reduction <add>, %27, %cst_11 [1] : vector<2x8x32xf32> to vector<2x32xf32>
    %c0_12 = arith.constant 0 : index
    %c0_13 = arith.constant 0 : index
    %29 = vector.load %arg5[%c0_12, %c0_13] : memref<2x32xf32, #tpu.memory_space<vmem>>, vector<2x32xf32>
    tpu.vector_store %arg5[%c0_12, %c0_13], %28 {strides = array<i32>} : memref<2x32xf32, #tpu.memory_space<vmem>>, vector<2x32xf32>,
    return
  }
  func.func @transform_0(%arg0: i32) -> (i32, i32, i32) {
    %c0_i32 = arith.constant 0 : i32
    %c0_i32_0 = arith.constant 0 : i32
    %c0_i32_1 = arith.constant 0 : i32
    return %arg0, %c0_i32, %c0_i32_0 : i32, i32, i32
  }
  func.func @transform_1(%arg0: i32) -> (i32, i32) {
    %c0_i32 = arith.constant 0 : i32
    %c0_i32_0 = arith.constant 0 : i32
    return %arg0, %c0_i32 : i32, i32
  }
  func.func @transform_2(%arg0: i32) -> (i32, i32) {
    %c0_i32 = arith.constant 0 : i32
    %c0_i32_0 = arith.constant 0 : i32
    %c0_i32_1 = arith.constant 0 : i32
    return %c0_i32, %c0_i32_0 : i32, i32
  }
  func.func @transform_3(%arg0: i32) -> (i32, i32) {
    %c0_i32 = arith.constant 0 : i32
    %c0_i32_0 = arith.constant 0 : i32
    %c0_i32_1 = arith.constant 0 : i32
    return %c0_i32, %c0_i32_0 : i32, i32
  }
  func.func @transform_4(%arg0: i32) -> (i32, i32) {
    %c0_i32 = arith.constant 0 : i32
    %c0_i32_0 = arith.constant 0 : i32
    return %arg0, %c0_i32 : i32, i32
  }
}

</mosaic_0001>

<llo_original>
// kernel: tpu_custom_call.1
$region0: #{tpu_custom_call.1}
  #allocation0 [shape = 'u32[]', space=smem, size = 0x4, offset = 0x4, fixed_abs, tag = 'smem constant byte address 0x4 - core index']
  #allocation1 [shape = 'u32[144,128]{1,0:T(1,128)}', space=vmem, size = 0x12000, scoped, tag = 'internal scratch']
  %s0 = inlined_call_operand.hbm [shape: f32[2,8,32], index: 0, kind: input, shape index: {}]
  %s1 = inlined_call_operand.vmem [shape: f32[2,32], index: 1, kind: input, shape index: {}]
  %s2 = inlined_call_operand.hbm [shape: f32[32,32], index: 2, kind: input, shape index: {}]
  %s3 = inlined_call_operand.vmem [shape: f32[1,32], index: 3, kind: input, shape index: {}]
  %s4 = inlined_call_operand.hbm [shape: f32[2,32], index: 4, kind: output, shape index: {}]
  %s5 = sld [smem:[#allocation0]]
  $region34: #{tpu_custom_call.1} parent=0
    _
  %s7 = ssub.s32 1, %s5
  %s8 = scalar_select 0, %s7, %s5
  $region1: #{tpu_custom_call.1} parent=0
    #allocation2 [shape = 'u8[8192]{0}', space=vmem, size = 0x2000, scoped, tag = 'input window, operand 0, single buffered']
    #allocation3 [shape = 's32[1]{0}', space=sflag, size = 0x4, scoped, tag = 'scoped memory for tpu_custom_call.1']
    #allocation4 [shape = 's32[1]{0}', space=sflag, size = 0x4, scoped, tag = 'scoped memory for tpu_custom_call.1']
    #allocation5 [shape = 'u8[16384]{0}', space=vmem, size = 0x4000, scoped, tag = 'input window, operand 2, single buffered']
    #allocation6 [shape = 's32[1]{0}', space=sflag, size = 0x4, scoped, tag = 'scoped memory for tpu_custom_call.1']
    #allocation7 [shape = 'u8[1024]{0}', space=vmem, size = 0x400, scoped, tag = 'output window, operand 0, single buffered']
    %9 = vsyncpa [#allocation3], 0
    %10 = vsyncpa [#allocation6], 0
    %11 = vsyncpa [#allocation4], 0
    // Predicated region
    $region2: #{tpu_custom_call.1} parent=1 // pred_check
      _
    $region3: #{tpu_custom_call.1} parent=1 // pred_check_branch
      %13 = sbr.rel (0) target = $region5
    $region4: #{tpu_custom_call.1} parent=1 // pred_region
      %s15 = ssub.s32 256, 256
      %16 = vsyncadd [#allocation3], %s15
      %s17 = sshll.u32 [#allocation2], 4
      %s18 = int_to_ptr.vmem [resolvable:$true] %s17
      %23 = dma.hbm_to_vmem [thread:$0]  %s0, 256, %s18, [#allocation3], 128, 128, 8
    $region5: #{tpu_custom_call.1} parent=1 // pred_fallthru
      _
    // Predicated region
    $region6: #{tpu_custom_call.1} parent=1 // pred_check
      _
    $region7: #{tpu_custom_call.1} parent=1 // pred_check_branch
      %25 = sbr.rel (0) target = $region9
    $region8: #{tpu_custom_call.1} parent=1 // pred_region
      _
    $region9: #{tpu_custom_call.1} parent=1 // pred_fallthru
      _
    // Predicated region
    $region10: #{tpu_custom_call.1} parent=1 // pred_check
      _
    $region11: #{tpu_custom_call.1} parent=1 // pred_check_branch
      %27 = sbr.rel (0) target = $region13
    $region12: #{tpu_custom_call.1} parent=1 // pred_region
      %s29 = ssub.s32 512, 512
      %30 = vsyncadd [#allocation6], %s29
      %s31 = sshll.u32 [#allocation5], 4
      %s32 = int_to_ptr.vmem [resolvable:$true] %s31
      %37 = dma.hbm_to_vmem [thread:$0]  %s2, 512, %s32, [#allocation6], 128, 128, 8
    $region13: #{tpu_custom_call.1} parent=1 // pred_fallthru
      _
    // Predicated region
    $region14: #{tpu_custom_call.1} parent=1 // pred_check
      _
    $region15: #{tpu_custom_call.1} parent=1 // pred_check_branch
      %39 = sbr.rel (0) target = $region17
    $region16: #{tpu_custom_call.1} parent=1 // pred_region
      _
    $region17: #{tpu_custom_call.1} parent=1 // pred_fallthru
      _
    // Predicated region
    $region18: #{tpu_custom_call.1} parent=1 // pred_check
      _
    $region19: #{tpu_custom_call.1} parent=1 // pred_check_branch
      %41 = sbr.rel (0) target = $region21
    $region20: #{tpu_custom_call.1} parent=1 // pred_region
      %42 = dma.done [#allocation3], 256
    $region21: #{tpu_custom_call.1} parent=1 // pred_fallthru
      _
    // Predicated region
    $region22: #{tpu_custom_call.1} parent=1 // pred_check
      _
    $region23: #{tpu_custom_call.1} parent=1 // pred_check_branch
      %44 = sbr.rel (0) target = $region25
    $region24: #{tpu_custom_call.1} parent=1 // pred_region
      %45 = dma.done [#allocation6], 512
    $region25: #{tpu_custom_call.1} parent=1 // pred_fallthru
      _
    %v46 = vld [vmem:[#allocation2] sm:$0xff]
    %v47 = vld [vmem:[#allocation2 + $0x8] sm:$0xff]
    %v48 = vld [vmem:[#allocation5] sm:$0xff]
    %v49 = vld [vmem:[#allocation5 + $0x8] sm:$0xff]
    %v50 = vld [vmem:[#allocation5 + $0x10] sm:$0xff]
    %v51 = vld [vmem:[#allocation5 + $0x18] sm:$0xff]
    %vm52 = vcmask 261120
    %v54 = vsel %vm52, %v46, 0
    %v57 = vsel %vm52, %v47, 0
    %59 = vmatprep.subr.mxu0 0.0
    %60 = vmatpush1.msra.mxu0 %v48
    %61 = vmatprep.subr.mxu0 0.0
    %62 = vmatpush1.msra.mxu0 %v49
    %63 = vmatprep.subr.mxu0 0.0
    %64 = vmatpush1.msra.mxu0 %v50
    %65 = vmatprep.subr.mxu0 0.0
    %66 = vmatpush1.msra.mxu0 %v51
    %67 = vmatprep.subr.mxu0 0.0
    %68 = vmatpush1.msra.mxu0 0.0
    %69 = vmatprep.subr.mxu0 0.0
    %70 = vmatpush1.msra.mxu0 0.0
    %71 = vmatprep.subr.mxu0 0.0
    %72 = vmatpush1.msra.mxu0 0.0
    %73 = vmatprep.subr.mxu0 0.0
    %74 = vmatpush1.msra.mxu0 0.0
    %75 = vmatprep.subr.mxu0 0.0
    %76 = vmatpush1.msra.mxu0 0.0
    %77 = vmatprep.subr.mxu0 0.0
    %78 = vmatpush1.msra.mxu0 0.0
    %79 = vmatprep.subr.mxu0 0.0
    %80 = vmatpush1.msra.mxu0 0.0
    %81 = vmatprep.subr.mxu0 0.0
    %82 = vmatpush1.msra.mxu0 0.0
    %83 = vmatprep.subr.mxu0 0.0
    %84 = vmatpush1.msra.mxu0 0.0
    %85 = vmatprep.subr.mxu0 0.0
    %86 = vmatpush1.msra.mxu0 0.0
    %87 = vmatprep.subr.mxu0 0.0
    %88 = vmatpush1.msra.mxu0 0.0
    %89 = vmatprep.subr.mxu0 0.0
    %90 = vmatpush1.msra.mxu0 0.0
    %91 = vmatprep.subr.mxu0 0.0
    %92 = vmatpush1.msra.mxu0 0.0
    %93 = vmatprep.subr.mxu0 0.0
    %94 = vmatpush1.msra.mxu0 0.0
    %95 = vmatprep.subr.mxu0 0.0
    %96 = vmatpush1.msra.mxu0 0.0
    %97 = vmatprep.subr.mxu0 0.0
    %98 = vmatpush1.msra.mxu0 0.0
    %99 = vmatprep.subr.mxu0 0.0
    %100 = vmatpush1.msra.mxu0 0.0
    %101 = vmatprep.subr.mxu0 0.0
    %102 = vmatpush1.msra.mxu0 0.0
    %103 = vmatprep.subr.mxu0 0.0
    %104 = vmatpush1.msra.mxu0 0.0
    %105 = vmatprep.subr.mxu0 0.0
    %106 = vmatpush1.msra.mxu0 0.0
    %107 = vmatprep.subr.mxu0 0.0
    %108 = vmatpush1.msra.mxu0 0.0
    %109 = vmatprep.subr.mxu0 0.0
    %110 = vmatpush1.msra.mxu0 0.0
    %111 = vmatprep.subr.mxu0 0.0
    %112 = vmatpush1.msra.mxu0 0.0
    %113 = vmatprep.subr.mxu0 0.0
    %114 = vmatpush1.msra.mxu0 0.0
    %115 = vmatprep.subr.mxu0 0.0
    %116 = vmatpush1.msra.mxu0 0.0
    %117 = vmatprep.subr.mxu0 0.0
    %118 = vmatpush1.msra.mxu0 0.0
    %119 = vmatprep.subr.mxu0 0.0
    %120 = vmatpush1.msra.mxu0 0.0
    %121 = vmatprep.subr.mxu0 0.0
    %122 = vmatpush1.msra.mxu0 0.0
    %123 = vmatprep.mubr.f32.mxu0 0.0
    %124 = vmatmul.mubr.f32.gmra.mrb[0].mxu0 %v54
    %v125 = vpop.f32.mrb[0].mxu0
    %v126 = vadd.f32 0.0, %v125
    %v127 = vpop.f32.mrb[0].mxu0
    %128 = vmatprep.mubr.f32.mxu0 0.0
    %129 = vmatmul.mubr.f32.gmra.mrb[0].mxu0 %v57
    %v130 = vpop.f32.mrb[0].mxu0
    %v131 = vadd.f32 0.0, %v130
    %v132 = vpop.f32.mrb[0].mxu0
    %133 = vdwg.mxu0
    %v134 = vld [vmem:[%s1] sm:$0x3]
    %v137 = vunpack.c.l.s4 1966171168
    %v138 = vunpack.c.0.s8 %v137
    %v139 = vlaneseq
    %v140 = vshrl.u32 %v139, 7
    %v141 = vsub.s32 %v138, %v140
    %v142 = vrot.slane %v134, %v141
    %v143 = vcombine.high %v142, %v142
    %v145 = vunpack.c.l.s4 1966171168
    %v146 = vunpack.c.0.s8 %v145
    %v147 = vlaneseq
    %v148 = vshrl.u32 %v147, 7
    %v149 = vsub.s32 %v146, %v148
    %v150 = vrot.slane %v142, %v149
    %v152 = vunpack.c.l.s4 1966171168
    %v153 = vunpack.c.0.s8 %v152
    %v154 = vlaneseq
    %v155 = vshrl.u32 %v154, 7
    %v156 = vsub.s32 %v153, %v155
    %v157 = vrot.slane %v143, %v156
    %v158 = vlaneseq
    %v159 = vshrl.u32 %v158, 7
    %v160 = vsub.s32 0, %v159
    %v161 = vrot.slane %v150, %v160
    %v162 = vlaneseq
    %v163 = vshrl.u32 %v162, 7
    %v164 = vsub.s32 0, %v163
    %v165 = vrot.slane %v157, %v164
    %v168 = vadd.f32 %v126, %v161
    %v169 = vadd.f32 %v131, %v165
    %v170 = vtanh.pop %v168
    %v171 = vtanh.pop %v169
    %v172 = vld [vmem:[%s3] sm:$0x1]
    %v174 = vlaneseq
    %v175 = vshrl.u32 %v174, 7
    %v176 = vsub.s32 0, %v175
    %v177 = vrot.slane %v172, %v176
    %v179 = vmul.f32 %v170, %v177
    %v180 = vmul.f32 %v171, %v177
    %v181 = vsel %vm52, %v179, 0.0
    %182 = vadd.xlane.f32.xlu0 %v181
    %v183 = vpop.xlane.xlu0 %182
    %v184 = vsel %vm52, %v180, 0.0
    %185 = vadd.xlane.f32.xlu0 %v184
    %v186 = vpop.xlane.xlu0 %185
    %v189 = vlaneseq
    %v190 = vand.u32 %v189, 127
    %v191 = vlaneseq
    %v192 = vshrl.u32 %v191, 7
    %v193 = vsub.s32 %v190, %v192
    %v194 = vrot.slane %v183, %v193
    %v195 = vlaneseq
    %v196 = vshrl.u32 %v195, 7
    %v197 = vsub.s32 %v190, %v196
    %v198 = vrot.slane %v186, %v197
    %vm199 = vcmask 1041409
    %v200 = vsel %vm199, %v198, %v194
    %vm202 = vcmask 58368
    %v203 = vsel %vm202, %v200, -inf
    %204 = vmax.xlane.f32.xlu0 %v203
    %v205 = vpop.xlane.xlu0 %204
    %v207 = vlaneseq
    %v208 = vshrl.u32 %v207, 7
    %v209 = vsub.s32 0, %v208
    %v210 = vrot.slane %v205, %v209
    %v211 = vlaneseq
    %v212 = vshrl.u32 %v211, 7
    %v213 = vsub.s32 1, %v212
    %v214 = vrot.slane %v205, %v213
    %v217 = vsub.f32 %v183, %v210
    %v218 = vsub.f32 %v186, %v214
    %v219 = vmul.f32 %v217, 1.442695
    %v220 = vpow.pop %v219
    %v221 = vmul.f32 %v218, 1.442695
    %v222 = vpow.pop %v221
    %225 = vset.pattern.permute.xlu0 0
    %226 = vperm.xlu0 %225, %v220
    %v227 = vpop.permute.xlu0 %226
    %228 = vset.pattern.permute.xlu0 0
    %229 = vperm.xlu0 %228, %v222
    %v230 = vpop.permute.xlu0 %229
    %v231 = vlaneseq
    %v232 = vshrl.u32 %v231, 7
    %v233 = vsub.s32 %v190, %v232
    %v234 = vrot.slane %v227, %v233
    %v235 = vlaneseq
    %v236 = vshrl.u32 %v235, 7
    %v237 = vsub.s32 %v190, %v236
    %v238 = vrot.slane %v230, %v237
    %v239 = vsel %vm199, %v238, %v234
    %v241 = vsel %vm202, %v239, 0.0
    %242 = vadd.xlane.f32.xlu0 %v241
    %v243 = vpop.xlane.xlu0 %242
    %v244 = vrcp.pop %v243
    %v246 = vlaneseq
    %v247 = vshrl.u32 %v246, 7
    %v248 = vsub.s32 0, %v247
    %v249 = vrot.slane %v244, %v248
    %v250 = vlaneseq
    %v251 = vshrl.u32 %v250, 7
    %v252 = vsub.s32 1, %v251
    %v253 = vrot.slane %v244, %v252
    %v256 = vmul.f32 %v220, %v249
    %v257 = vmul.f32 %v222, %v253
    %259 = vset.pattern.permute.xlu0 0
    %260 = vperm.xlu0 %259, %v256
    %v261 = vpop.permute.xlu0 %260
    %264 = vset.pattern.permute.xlu0 0
    %265 = vperm.xlu0 %264, %v257
    %v266 = vpop.permute.xlu0 %265
    %v268 = vmul.f32 %v261, %v46
    %v269 = vmul.f32 %v266, %v47
    %v270 = vsel %vm52, %v268, 0.0
    %v271 = vrot.slane %v270, 4
    %v272 = vadd.f32 %v270, %v271
    %v273 = vrot.slane %v272, 2
    %v274 = vadd.f32 %v272, %v273
    %v275 = vrot.slane %v274, 1
    %v276 = vadd.f32 %v274, %v275
    %v277 = vsel %vm52, %v269, 0.0
    %v278 = vrot.slane %v277, 4
    %v279 = vadd.f32 %v277, %v278
    %v280 = vrot.slane %v279, 2
    %v281 = vadd.f32 %v279, %v280
    %v282 = vrot.slane %v281, 1
    %v283 = vadd.f32 %v281, %v282
    %v286 = vsel %vm199, %v283, %v276
    %vm288 = vcmask 254976
    %289 = vst.msk [vmem:[#allocation7] sm:$0x3] %vm288, %v286
    // Predicated region
    $region26: #{tpu_custom_call.1} parent=1 // pred_check
      _
    $region27: #{tpu_custom_call.1} parent=1 // pred_check_branch
      %291 = sbr.rel (0) target = $region29
    $region28: #{tpu_custom_call.1} parent=1 // pred_region
      %s293 = ssub.s32 32, 32
      %294 = vsyncadd [#allocation4], %s293
      %s296 = sshll.u32 [#allocation7], 4
      %s297 = int_to_ptr.vmem [resolvable:$true] %s296
      %299 = dma.vmem_to_hbm [thread:$0]  %s297, 32, %s4, [#allocation4]
    $region29: #{tpu_custom_call.1} parent=1 // pred_fallthru
      _
    // Predicated region
    $region30: #{tpu_custom_call.1} parent=1 // pred_check
      _
    $region31: #{tpu_custom_call.1} parent=1 // pred_check_branch
      %301 = sbr.rel (0) target = $region33
    $region32: #{tpu_custom_call.1} parent=1 // pred_region
      %302 = dma.done [#allocation4], 32
    $region33: #{tpu_custom_call.1} parent=1 // pred_fallthru
      _
    %303 = vsyncpa [#allocation3], 1
    %304 = vsyncpa [#allocation6], 1
    %305 = vsyncpa [#allocation4], 1

</llo_original>
